<compile_context>
chip_gen: v7x
topology: tpu7x:2x2x1
jax: 0.10.0
libtpu: 0.0.40
codegen_flags: <defaults>
</compile_context>

<pallas_src>
import jax
import jax.numpy as jnp
from jax.experimental import pallas as pl
from jax.experimental.pallas import tpu as pltpu

EMBED_DIMENSION = 128     # embedding dim D (multiple of 128 for lane alignment)
EMBED_MAX_NORM = 1.0      # nn.Embedding(max_norm=...) behaviour


def cbow_kernel(counts_ref, emb_ref, w_ref, b_ref, out_ref):
    """counts_ref: (TB, V) f32 (one-hot counts, pre-divided by C);
    emb_ref: (V, D) f32 resident table; w_ref: (D, V) f32 (linear weight^T);
    b_ref: (1, V) f32; out_ref: (TB, V) f32."""
    emb = emb_ref[...]                                           # (V, D)

    # nn.Embedding(max_norm=...): rescale rows whose L2 norm exceeds max_norm.
    # PyTorch-faithful formula: scale = max_norm / (norm + 1e-7).
    # TODO(synk): PyTorch also writes the renormed rows back into the embedding
    # weight in place; that side effect only matters for reuse / backward.
    sqnorm = jnp.sum(emb * emb, axis=-1, keepdims=True)          # (V, 1)
    norm = jnp.sqrt(sqnorm)
    scale = jnp.where(norm > EMBED_MAX_NORM,
                      EMBED_MAX_NORM / (norm + jnp.float32(1e-7)),
                      jnp.float32(1.0))
    emb_rn = emb * scale                                         # (V, D)

    # Context gather + mean as a single MXU matmul against the count matrix
    # (the 1/C mean is already folded into counts).
    x = jnp.dot(counts_ref[...], emb_rn,
                preferred_element_type=jnp.float32)              # (TB, D)

    # Linear layer: one batched MXU matmul + bias, lane-dense (TB, V) store.
    out_ref[...] = (jnp.dot(x, w_ref[...],
                            preferred_element_type=jnp.float32)
                    + b_ref[...]).astype(out_ref.dtype)


def cbow_forward(indices, emb, w, bias):
    """indices: (B, C) int32; emb: (V, D) f32; w: (V, D) f32 (nn.Linear weight);
    bias: (V,) f32.  Returns (B, V) f32 logits."""
    B, C = indices.shape
    V, D = emb.shape

    # counts[b, v] = (#times v appears in context b) / C.  This turns the
    # embedding gather + mean into one count-matrix @ table MXU matmul in-kernel.
    counts = jnp.sum(jax.nn.one_hot(indices, V, dtype=jnp.float32), axis=1)
    counts = counts * jnp.float32(1.0 / C)                       # (B, V)

    w_t = w.T                                                    # (D, V)
    bias_2d = bias.reshape(1, V)

    # Batch tile: full batch here (trivially fits VMEM); for large B use
    # TB = 128/256 so the MXU M-dim is full and the "parallel" axis can shard
    # across v7x's 2 TensorCores.
    TB = B
    grid = (pl.cdiv(B, TB),)

    return pl.pallas_call(
        cbow_kernel,
        out_shape=jax.ShapeDtypeStruct((B, V), jnp.float32),
        grid=grid,
        in_specs=[
            pl.BlockSpec((TB, V), lambda i: (i, 0)),   # count matrix (batch-tiled)
            pl.BlockSpec((V, D), lambda i: (0, 0)),    # resident embedding table
            pl.BlockSpec((D, V), lambda i: (0, 0)),    # resident linear weight^T
            pl.BlockSpec((1, V), lambda i: (0, 0)),    # bias
        ],
        out_specs=pl.BlockSpec((TB, V), lambda i: (i, 0)),
        compiler_params=pltpu.CompilerParams(
            dimension_semantics=("parallel",)),
    )(counts, emb, w_t, bias_2d)


if __name__ == "__main__":
    VOCAB_SIZE = 256
    B, C, D = 8, 8, EMBED_DIMENSION

    key = jax.random.PRNGKey(0)
    k_idx, k_emb, k_w, k_b = jax.random.split(key, 4)

    indices = jax.random.randint(k_idx, (B, C), 0, VOCAB_SIZE, dtype=jnp.int32)
    # Deterministic parameter init (synthetic; mimics nn.Embedding / nn.Linear shapes).
    emb = jax.random.normal(k_emb, (VOCAB_SIZE, D), dtype=jnp.float32)
    w = jax.random.normal(k_w, (VOCAB_SIZE, D), dtype=jnp.float32) * (1.0 / jnp.sqrt(D))
    bias = jax.random.normal(k_b, (VOCAB_SIZE,), dtype=jnp.float32) * 0.01

    out = cbow_forward(indices, emb, w, bias)
    out = jax.block_until_ready(out)

    # Pure-JAX reference (PyTorch-faithful renorm with eps), gather formulation.
    gathered = emb[indices]                                        # (B, C, D)
    norms = jnp.sqrt(jnp.sum(gathered * gathered, axis=-1, keepdims=True))
    scale = jnp.where(norms > EMBED_MAX_NORM,
                      EMBED_MAX_NORM / (norms + 1e-7), 1.0)
    x = (gathered * scale).mean(axis=1)                            # (B, D)
    ref = x @ w.T + bias                                           # (B, V)

    assert out.shape == (B, VOCAB_SIZE)
    assert jnp.allclose(out, ref, atol=1e-4, rtol=1e-4), "mismatch vs reference"

    print("KERNEL_OK")
</pallas_src>

<mosaic_0001>
module attributes {stable_mosaic.version = 11 : i64} {
  func.func @cbow_kernel(%arg0: i32, %arg1: memref<8x256xf32, #tpu.memory_space<vmem>>, %arg2: memref<256x128xf32, #tpu.memory_space<vmem>>, %arg3: memref<128x256xf32, #tpu.memory_space<vmem>>, %arg4: memref<1x256xf32, #tpu.memory_space<vmem>>, %arg5: memref<8x256xf32, #tpu.memory_space<vmem>>) attributes {dimension_semantics = [#tpu.dimension_semantics<parallel>], iteration_bounds = array<i64: 1>, scalar_prefetch = 0 : i64, scratch_operands = 0 : i64, tpu.core_type = #tpu.core_type<tc>, window_params = [{transform_indices = @transform_0, window_bounds = array<i64: 8, 256>}, {pipeline_mode = #tpu.pipeline_mode<synchronous>, transform_indices = @transform_1, window_bounds = array<i64: 256, 128>}, {pipeline_mode = #tpu.pipeline_mode<synchronous>, transform_indices = @transform_2, window_bounds = array<i64: 128, 256>}, {pipeline_mode = #tpu.pipeline_mode<synchronous>, transform_indices = @transform_3, window_bounds = array<i64: 1, 256>}, {transform_indices = @transform_4, window_bounds = array<i64: 8, 256>}]} {
    %c0 = arith.constant 0 : index
    %c0_0 = arith.constant 0 : index
    %0 = vector.load %arg2[%c0, %c0_0] : memref<256x128xf32, #tpu.memory_space<vmem>>, vector<256x128xf32>
    %1 = arith.mulf %0, %0 : vector<256x128xf32>
    %cst = arith.constant dense<0.000000e+00> : vector<256xf32>
    %2 = vector.multi_reduction <add>, %1, %cst [1] : vector<256x128xf32> to vector<256xf32>
    %3 = vector.shape_cast %2 : vector<256xf32> to vector<256x1xf32>
    %4 = math.sqrt %3 : vector<256x1xf32>
    %cst_1 = arith.constant 1.000000e+00 : f32
    %5 = vector.broadcast %cst_1 : f32 to vector<256x1xf32>
    %6 = arith.cmpf ogt, %4, %5 : vector<256x1xf32>
    %cst_2 = arith.constant 1.000000e-07 : f32
    %7 = vector.broadcast %cst_2 : f32 to vector<256x1xf32>
    %8 = arith.addf %4, %7 : vector<256x1xf32>
    %cst_3 = arith.constant 1.000000e+00 : f32
    %9 = vector.broadcast %cst_3 : f32 to vector<256x1xf32>
    %10 = arith.divf %9, %8 : vector<256x1xf32>
    %cst_4 = arith.constant 1.000000e+00 : f32
    %11 = vector.broadcast %cst_4 : f32 to vector<256x1xf32>
    %12 = arith.select %6, %10, %11 : vector<256x1xi1>, vector<256x1xf32>
    %13 = vector.broadcast %12 : vector<256x1xf32> to vector<256x128xf32>
    %14 = arith.mulf %0, %13 : vector<256x128xf32>
    %c0_5 = arith.constant 0 : index
    %c0_6 = arith.constant 0 : index
    %15 = vector.load %arg1[%c0_5, %c0_6] : memref<8x256xf32, #tpu.memory_space<vmem>>, vector<8x256xf32>
    %cst_7 = arith.constant dense<0.000000e+00> : vector<8x128xf32>
    %16 = tpu.matmul %15, %14, %cst_7 {dimension_numbers = #tpu.dot_dimension_numbers<[1], [0], [0], [1], [0, 0, 1, 1], [], []>} : vector<8x256xf32>, vector<256x128xf32>, vector<8x128xf32> -> vector<8x128xf32>
    %c0_8 = arith.constant 0 : index
    %c0_9 = arith.constant 0 : index
    %17 = vector.load %arg3[%c0_8, %c0_9] : memref<128x256xf32, #tpu.memory_space<vmem>>, vector<128x256xf32>
    %cst_10 = arith.constant dense<0.000000e+00> : vector<8x256xf32>
    %18 = tpu.matmul %16, %17, %cst_10 {dimension_numbers = #tpu.dot_dimension_numbers<[1], [0], [0], [1], [0, 0, 1, 1], [], []>} : vector<8x128xf32>, vector<128x256xf32>, vector<8x256xf32> -> vector<8x256xf32>
    %c0_11 = arith.constant 0 : index
    %c0_12 = arith.constant 0 : index
    %19 = vector.load %arg4[%c0_11, %c0_12] : memref<1x256xf32, #tpu.memory_space<vmem>>, vector<1x256xf32>
    %20 = vector.broadcast %19 : vector<1x256xf32> to vector<8x256xf32>
    %21 = arith.addf %18, %20 : vector<8x256xf32>
    %c0_13 = arith.constant 0 : index
    %c0_14 = arith.constant 0 : index
    %22 = vector.load %arg5[%c0_13, %c0_14] : memref<8x256xf32, #tpu.memory_space<vmem>>, vector<8x256xf32>
    tpu.vector_store %arg5[%c0_13, %c0_14], %21 {strides = array<i32>} : memref<8x256xf32, #tpu.memory_space<vmem>>, vector<8x256xf32>,
    return
  }
  func.func @transform_0(%arg0: i32) -> (i32, i32) {
    %c0_i32 = arith.constant 0 : i32
    %c0_i32_0 = arith.constant 0 : i32
    return %arg0, %c0_i32 : i32, i32
  }
  func.func @transform_1(%arg0: i32) -> (i32, i32) {
    %c0_i32 = arith.constant 0 : i32
    %c0_i32_0 = arith.constant 0 : i32
    %c0_i32_1 = arith.constant 0 : i32
    return %c0_i32, %c0_i32_0 : i32, i32
  }
  func.func @transform_2(%arg0: i32) -> (i32, i32) {
    %c0_i32 = arith.constant 0 : i32
    %c0_i32_0 = arith.constant 0 : i32
    %c0_i32_1 = arith.constant 0 : i32
    return %c0_i32, %c0_i32_0 : i32, i32
  }
  func.func @transform_3(%arg0: i32) -> (i32, i32) {
    %c0_i32 = arith.constant 0 : i32
    %c0_i32_0 = arith.constant 0 : i32
    %c0_i32_1 = arith.constant 0 : i32
    return %c0_i32, %c0_i32_0 : i32, i32
  }
  func.func @transform_4(%arg0: i32) -> (i32, i32) {
    %c0_i32 = arith.constant 0 : i32
    %c0_i32_0 = arith.constant 0 : i32
    return %arg0, %c0_i32 : i32, i32
  }
}

</mosaic_0001>

<llo_original>
// kernel: tpu_custom_call.1
$region0: #{tpu_custom_call.1}
  #allocation0 [shape = 'u32[]', space=smem, size = 0x4, offset = 0x4, fixed_abs, tag = 'smem constant byte address 0x4 - core index']
  #allocation1 [shape = 'u32[144,128]{1,0:T(1,128)}', space=vmem, size = 0x12000, scoped, tag = 'internal scratch']
  %s0 = inlined_call_operand.hbm [shape: f32[8,256], index: 0, kind: input, shape index: {}]
  %s1 = inlined_call_operand.hbm [shape: f32[256,128], index: 1, kind: input, shape index: {}]
  %s2 = inlined_call_operand.hbm [shape: f32[128,256], index: 2, kind: input, shape index: {}]
  %s3 = inlined_call_operand.vmem [shape: f32[1,256], index: 3, kind: input, shape index: {}]
  %s4 = inlined_call_operand.hbm [shape: f32[8,256], index: 4, kind: output, shape index: {}]
  %s5 = sld [smem:[#allocation0]]
  $region38: #{tpu_custom_call.1} parent=0
    _
  %s7 = ssub.s32 1, %s5
  %s8 = scalar_select 0, %s7, %s5
  $region1: #{tpu_custom_call.1} parent=0
    #allocation2 [shape = 'u8[8192]{0}', space=vmem, size = 0x2000, scoped, tag = 'input window, operand 0, single buffered']
    #allocation3 [shape = 's32[1]{0}', space=sflag, size = 0x4, scoped, tag = 'scoped memory for tpu_custom_call.1']
    #allocation4 [shape = 's32[1]{0}', space=sflag, size = 0x4, scoped, tag = 'scoped memory for tpu_custom_call.1']
    #allocation5 [shape = 'u8[131072]{0}', space=vmem, size = 0x20000, scoped, tag = 'input window, operand 1, single buffered']
    #allocation6 [shape = 's32[1]{0}', space=sflag, size = 0x4, scoped, tag = 'scoped memory for tpu_custom_call.1']
    #allocation7 [shape = 'u8[131072]{0}', space=vmem, size = 0x20000, scoped, tag = 'input window, operand 2, single buffered']
    #allocation8 [shape = 'u8[8192]{0}', space=vmem, size = 0x2000, scoped, tag = 'output window, operand 0, single buffered']
    %9 = vsyncpa [#allocation3], 0
    %10 = vsyncpa [#allocation6], 0
    %11 = vsyncpa [#allocation4], 0
    // Predicated region
    $region2: #{tpu_custom_call.1} parent=1 // pred_check
      _
    $region3: #{tpu_custom_call.1} parent=1 // pred_check_branch
      %13 = sbr.rel (0) target = $region5
    $region4: #{tpu_custom_call.1} parent=1 // pred_region
      %s15 = ssub.s32 256, 256
      %16 = vsyncadd [#allocation3], %s15
      %s18 = sshll.u32 [#allocation2], 4
      %s19 = int_to_ptr.vmem [resolvable:$true] %s18
      %21 = dma.hbm_to_vmem [thread:$0]  %s0, 256, %s19, [#allocation3]
    $region5: #{tpu_custom_call.1} parent=1 // pred_fallthru
      _
    // Predicated region
    $region6: #{tpu_custom_call.1} parent=1 // pred_check
      _
    $region7: #{tpu_custom_call.1} parent=1 // pred_check_branch
      %23 = sbr.rel (0) target = $region9
    $region8: #{tpu_custom_call.1} parent=1 // pred_region
      %s25 = ssub.s32 4096, 4096
      %26 = vsyncadd [#allocation6], %s25
      %s27 = sshll.u32 [#allocation5], 4
      %s28 = int_to_ptr.vmem [resolvable:$true] %s27
      %33 = dma.hbm_to_vmem [thread:$0]  %s1, 4096, %s28, [#allocation6], 128, 128, 8
    $region9: #{tpu_custom_call.1} parent=1 // pred_fallthru
      _
    // Predicated region
    $region10: #{tpu_custom_call.1} parent=1 // pred_check
      _
    $region11: #{tpu_custom_call.1} parent=1 // pred_check_branch
      %35 = sbr.rel (0) target = $region13
    $region12: #{tpu_custom_call.1} parent=1 // pred_region
      %s37 = ssub.s32 4096, 4096
      %38 = vsyncadd [#allocation6], %s37
      %s39 = sshll.u32 [#allocation7], 4
      %s40 = int_to_ptr.vmem [resolvable:$true] %s39
      %45 = dma.hbm_to_vmem [thread:$0]  %s2, 4096, %s40, [#allocation6], 256, 256, 16
    $region13: #{tpu_custom_call.1} parent=1 // pred_fallthru
      _
    // Predicated region
    $region14: #{tpu_custom_call.1} parent=1 // pred_check
      _
    $region15: #{tpu_custom_call.1} parent=1 // pred_check_branch
      %47 = sbr.rel (0) target = $region17
    $region16: #{tpu_custom_call.1} parent=1 // pred_region
      _
    $region17: #{tpu_custom_call.1} parent=1 // pred_fallthru
      _
    // Predicated region
    $region18: #{tpu_custom_call.1} parent=1 // pred_check
      _
    $region19: #{tpu_custom_call.1} parent=1 // pred_check_branch
      %49 = sbr.rel (0) target = $region21
    $region20: #{tpu_custom_call.1} parent=1 // pred_region
      %50 = dma.done [#allocation3], 256
    $region21: #{tpu_custom_call.1} parent=1 // pred_fallthru
      _
    // Predicated region
    $region22: #{tpu_custom_call.1} parent=1 // pred_check
      _
    $region23: #{tpu_custom_call.1} parent=1 // pred_check_branch
      %52 = sbr.rel (0) target = $region25
    $region24: #{tpu_custom_call.1} parent=1 // pred_region
      %53 = dma.done [#allocation6], 4096
    $region25: #{tpu_custom_call.1} parent=1 // pred_fallthru
      _
    // Predicated region
    $region26: #{tpu_custom_call.1} parent=1 // pred_check
      _
    $region27: #{tpu_custom_call.1} parent=1 // pred_check_branch
      %55 = sbr.rel (0) target = $region29
    $region28: #{tpu_custom_call.1} parent=1 // pred_region
      %56 = dma.done [#allocation6], 4096
    $region29: #{tpu_custom_call.1} parent=1 // pred_fallthru
      _
    %v57 = vld [vmem:[#allocation5] sm:$0xff]
    %v58 = vld [vmem:[#allocation5 + $0x8] sm:$0xff]
    %v59 = vld [vmem:[#allocation5 + $0x10] sm:$0xff]
    %v60 = vld [vmem:[#allocation5 + $0x18] sm:$0xff]
    %v61 = vld [vmem:[#allocation5 + $0x20] sm:$0xff]
    %v62 = vld [vmem:[#allocation5 + $0x28] sm:$0xff]
    %v63 = vld [vmem:[#allocation5 + $0x30] sm:$0xff]
    %v64 = vld [vmem:[#allocation5 + $0x38] sm:$0xff]
    %v65 = vld [vmem:[#allocation5 + $0x40] sm:$0xff]
    %v66 = vld [vmem:[#allocation5 + $0x48] sm:$0xff]
    %v67 = vld [vmem:[#allocation5 + $0x50] sm:$0xff]
    %v68 = vld [vmem:[#allocation5 + $0x58] sm:$0xff]
    %v69 = vld [vmem:[#allocation5 + $0x60] sm:$0xff]
    %v70 = vld [vmem:[#allocation5 + $0x68] sm:$0xff]
    %v71 = vld [vmem:[#allocation5 + $0x70] sm:$0xff]
    %v72 = vld [vmem:[#allocation5 + $0x78] sm:$0xff]
    %v73 = vld [vmem:[#allocation5 + $0x80] sm:$0xff]
    %v74 = vld [vmem:[#allocation5 + $0x88] sm:$0xff]
    %v75 = vld [vmem:[#allocation5 + $0x90] sm:$0xff]
    %v76 = vld [vmem:[#allocation5 + $0x98] sm:$0xff]
    %v77 = vld [vmem:[#allocation5 + $0xa0] sm:$0xff]
    %v78 = vld [vmem:[#allocation5 + $0xa8] sm:$0xff]
    %v79 = vld [vmem:[#allocation5 + $0xb0] sm:$0xff]
    %v80 = vld [vmem:[#allocation5 + $0xb8] sm:$0xff]
    %v81 = vld [vmem:[#allocation5 + $0xc0] sm:$0xff]
    %v82 = vld [vmem:[#allocation5 + $0xc8] sm:$0xff]
    %v83 = vld [vmem:[#allocation5 + $0xd0] sm:$0xff]
    %v84 = vld [vmem:[#allocation5 + $0xd8] sm:$0xff]
    %v85 = vld [vmem:[#allocation5 + $0xe0] sm:$0xff]
    %v86 = vld [vmem:[#allocation5 + $0xe8] sm:$0xff]
    %v87 = vld [vmem:[#allocation5 + $0xf0] sm:$0xff]
    %v88 = vld [vmem:[#allocation5 + $0xf8] sm:$0xff]
    %v89 = vmul.f32 %v57, %v57
    %v90 = vmul.f32 %v58, %v58
    %v91 = vmul.f32 %v59, %v59
    %v92 = vmul.f32 %v60, %v60
    %v93 = vmul.f32 %v61, %v61
    %v94 = vmul.f32 %v62, %v62
    %v95 = vmul.f32 %v63, %v63
    %v96 = vmul.f32 %v64, %v64
    %v97 = vmul.f32 %v65, %v65
    %v98 = vmul.f32 %v66, %v66
    %v99 = vmul.f32 %v67, %v67
    %v100 = vmul.f32 %v68, %v68
    %v101 = vmul.f32 %v69, %v69
    %v102 = vmul.f32 %v70, %v70
    %v103 = vmul.f32 %v71, %v71
    %v104 = vmul.f32 %v72, %v72
    %v105 = vmul.f32 %v73, %v73
    %v106 = vmul.f32 %v74, %v74
    %v107 = vmul.f32 %v75, %v75
    %v108 = vmul.f32 %v76, %v76
    %v109 = vmul.f32 %v77, %v77
    %v110 = vmul.f32 %v78, %v78
    %v111 = vmul.f32 %v79, %v79
    %v112 = vmul.f32 %v80, %v80
    %v113 = vmul.f32 %v81, %v81
    %v114 = vmul.f32 %v82, %v82
    %v115 = vmul.f32 %v83, %v83
    %v116 = vmul.f32 %v84, %v84
    %v117 = vmul.f32 %v85, %v85
    %v118 = vmul.f32 %v86, %v86
    %v119 = vmul.f32 %v87, %v87
    %v120 = vmul.f32 %v88, %v88
    %121 = vadd.xlane.f32.xlu0 %v89
    %v122 = vpop.xlane.xlu0 %121
    %123 = vadd.xlane.f32.xlu0 %v90
    %v124 = vpop.xlane.xlu0 %123
    %125 = vadd.xlane.f32.xlu0 %v91
    %v126 = vpop.xlane.xlu0 %125
    %127 = vadd.xlane.f32.xlu0 %v92
    %v128 = vpop.xlane.xlu0 %127
    %129 = vadd.xlane.f32.xlu0 %v93
    %v130 = vpop.xlane.xlu0 %129
    %131 = vadd.xlane.f32.xlu0 %v94
    %v132 = vpop.xlane.xlu0 %131
    %133 = vadd.xlane.f32.xlu0 %v95
    %v134 = vpop.xlane.xlu0 %133
    %135 = vadd.xlane.f32.xlu0 %v96
    %v136 = vpop.xlane.xlu0 %135
    %137 = vadd.xlane.f32.xlu0 %v97
    %v138 = vpop.xlane.xlu0 %137
    %139 = vadd.xlane.f32.xlu0 %v98
    %v140 = vpop.xlane.xlu0 %139
    %141 = vadd.xlane.f32.xlu0 %v99
    %v142 = vpop.xlane.xlu0 %141
    %143 = vadd.xlane.f32.xlu0 %v100
    %v144 = vpop.xlane.xlu0 %143
    %145 = vadd.xlane.f32.xlu0 %v101
    %v146 = vpop.xlane.xlu0 %145
    %147 = vadd.xlane.f32.xlu0 %v102
    %v148 = vpop.xlane.xlu0 %147
    %149 = vadd.xlane.f32.xlu0 %v103
    %v150 = vpop.xlane.xlu0 %149
    %151 = vadd.xlane.f32.xlu0 %v104
    %v152 = vpop.xlane.xlu0 %151
    %153 = vadd.xlane.f32.xlu0 %v105
    %v154 = vpop.xlane.xlu0 %153
    %155 = vadd.xlane.f32.xlu0 %v106
    %v156 = vpop.xlane.xlu0 %155
    %157 = vadd.xlane.f32.xlu0 %v107
    %v158 = vpop.xlane.xlu0 %157
    %159 = vadd.xlane.f32.xlu0 %v108
    %v160 = vpop.xlane.xlu0 %159
    %161 = vadd.xlane.f32.xlu0 %v109
    %v162 = vpop.xlane.xlu0 %161
    %163 = vadd.xlane.f32.xlu0 %v110
    %v164 = vpop.xlane.xlu0 %163
    %165 = vadd.xlane.f32.xlu0 %v111
    %v166 = vpop.xlane.xlu0 %165
    %167 = vadd.xlane.f32.xlu0 %v112
    %v168 = vpop.xlane.xlu0 %167
    %169 = vadd.xlane.f32.xlu0 %v113
    %v170 = vpop.xlane.xlu0 %169
    %171 = vadd.xlane.f32.xlu0 %v114
    %v172 = vpop.xlane.xlu0 %171
    %173 = vadd.xlane.f32.xlu0 %v115
    %v174 = vpop.xlane.xlu0 %173
    %175 = vadd.xlane.f32.xlu0 %v116
    %v176 = vpop.xlane.xlu0 %175
    %177 = vadd.xlane.f32.xlu0 %v117
    %v178 = vpop.xlane.xlu0 %177
    %179 = vadd.xlane.f32.xlu0 %v118
    %v180 = vpop.xlane.xlu0 %179
    %181 = vadd.xlane.f32.xlu0 %v119
    %v182 = vpop.xlane.xlu0 %181
    %183 = vadd.xlane.f32.xlu0 %v120
    %v184 = vpop.xlane.xlu0 %183
    %v185 = vrsqrt.pop %v122
    %v186 = vmul.f32 %v122, %v185
    %vm187 = vcmp.eq.f32.partialorder %v122, inf
    %v188 = vsel %vm187, %v122, %v186
    %vm189 = vcmp.eq.f32.partialorder %v122, 0.0
    %v190 = vand.u32 %v122, 2147483648
    %v191 = vsel %vm189, %v190, %v188
    %v192 = vrsqrt.pop %v124
    %v193 = vmul.f32 %v124, %v192
    %vm194 = vcmp.eq.f32.partialorder %v124, inf
    %v195 = vsel %vm194, %v124, %v193
    %vm196 = vcmp.eq.f32.partialorder %v124, 0.0
    %v197 = vand.u32 %v124, 2147483648
    %v198 = vsel %vm196, %v197, %v195
    %v199 = vrsqrt.pop %v126
    %v200 = vmul.f32 %v126, %v199
    %vm201 = vcmp.eq.f32.partialorder %v126, inf
    %v202 = vsel %vm201, %v126, %v200
    %vm203 = vcmp.eq.f32.partialorder %v126, 0.0
    %v204 = vand.u32 %v126, 2147483648
    %v205 = vsel %vm203, %v204, %v202
    %v206 = vrsqrt.pop %v128
    %v207 = vmul.f32 %v128, %v206
    %vm208 = vcmp.eq.f32.partialorder %v128, inf
    %v209 = vsel %vm208, %v128, %v207
    %vm210 = vcmp.eq.f32.partialorder %v128, 0.0
    %v211 = vand.u32 %v128, 2147483648
    %v212 = vsel %vm210, %v211, %v209
    %v213 = vrsqrt.pop %v130
    %v214 = vmul.f32 %v130, %v213
    %vm215 = vcmp.eq.f32.partialorder %v130, inf
    %v216 = vsel %vm215, %v130, %v214
    %vm217 = vcmp.eq.f32.partialorder %v130, 0.0
    %v218 = vand.u32 %v130, 2147483648
    %v219 = vsel %vm217, %v218, %v216
    %v220 = vrsqrt.pop %v132
    %v221 = vmul.f32 %v132, %v220
    %vm222 = vcmp.eq.f32.partialorder %v132, inf
    %v223 = vsel %vm222, %v132, %v221
    %vm224 = vcmp.eq.f32.partialorder %v132, 0.0
    %v225 = vand.u32 %v132, 2147483648
    %v226 = vsel %vm224, %v225, %v223
    %v227 = vrsqrt.pop %v134
    %v228 = vmul.f32 %v134, %v227
    %vm229 = vcmp.eq.f32.partialorder %v134, inf
    %v230 = vsel %vm229, %v134, %v228
    %vm231 = vcmp.eq.f32.partialorder %v134, 0.0
    %v232 = vand.u32 %v134, 2147483648
    %v233 = vsel %vm231, %v232, %v230
    %v234 = vrsqrt.pop %v136
    %v235 = vmul.f32 %v136, %v234
    %vm236 = vcmp.eq.f32.partialorder %v136, inf
    %v237 = vsel %vm236, %v136, %v235
    %vm238 = vcmp.eq.f32.partialorder %v136, 0.0
    %v239 = vand.u32 %v136, 2147483648
    %v240 = vsel %vm238, %v239, %v237
    %v241 = vrsqrt.pop %v138
    %v242 = vmul.f32 %v138, %v241
    %vm243 = vcmp.eq.f32.partialorder %v138, inf
    %v244 = vsel %vm243, %v138, %v242
    %vm245 = vcmp.eq.f32.partialorder %v138, 0.0
    %v246 = vand.u32 %v138, 2147483648
    %v247 = vsel %vm245, %v246, %v244
    %v248 = vrsqrt.pop %v140
    %v249 = vmul.f32 %v140, %v248
    %vm250 = vcmp.eq.f32.partialorder %v140, inf
    %v251 = vsel %vm250, %v140, %v249
    %vm252 = vcmp.eq.f32.partialorder %v140, 0.0
    %v253 = vand.u32 %v140, 2147483648
    %v254 = vsel %vm252, %v253, %v251
    %v255 = vrsqrt.pop %v142
    %v256 = vmul.f32 %v142, %v255
    %vm257 = vcmp.eq.f32.partialorder %v142, inf
    %v258 = vsel %vm257, %v142, %v256
    %vm259 = vcmp.eq.f32.partialorder %v142, 0.0
    %v260 = vand.u32 %v142, 2147483648
    %v261 = vsel %vm259, %v260, %v258
    %v262 = vrsqrt.pop %v144
    %v263 = vmul.f32 %v144, %v262
    %vm264 = vcmp.eq.f32.partialorder %v144, inf
    %v265 = vsel %vm264, %v144, %v263
    %vm266 = vcmp.eq.f32.partialorder %v144, 0.0
    %v267 = vand.u32 %v144, 2147483648
    %v268 = vsel %vm266, %v267, %v265
    %v269 = vrsqrt.pop %v146
    %v270 = vmul.f32 %v146, %v269
    %vm271 = vcmp.eq.f32.partialorder %v146, inf
    %v272 = vsel %vm271, %v146, %v270
    %vm273 = vcmp.eq.f32.partialorder %v146, 0.0
    %v274 = vand.u32 %v146, 2147483648
    %v275 = vsel %vm273, %v274, %v272
    %v276 = vrsqrt.pop %v148
    %v277 = vmul.f32 %v148, %v276
    %vm278 = vcmp.eq.f32.partialorder %v148, inf
    %v279 = vsel %vm278, %v148, %v277
    %vm280 = vcmp.eq.f32.partialorder %v148, 0.0
    %v281 = vand.u32 %v148, 2147483648
    %v282 = vsel %vm280, %v281, %v279
    %v283 = vrsqrt.pop %v150
    %v284 = vmul.f32 %v150, %v283
    %vm285 = vcmp.eq.f32.partialorder %v150, inf
    %v286 = vsel %vm285, %v150, %v284
    %vm287 = vcmp.eq.f32.partialorder %v150, 0.0
    %v288 = vand.u32 %v150, 2147483648
    %v289 = vsel %vm287, %v288, %v286
    %v290 = vrsqrt.pop %v152
    %v291 = vmul.f32 %v152, %v290
    %vm292 = vcmp.eq.f32.partialorder %v152, inf
    %v293 = vsel %vm292, %v152, %v291
    %vm294 = vcmp.eq.f32.partialorder %v152, 0.0
    %v295 = vand.u32 %v152, 2147483648
    %v296 = vsel %vm294, %v295, %v293
    %v297 = vrsqrt.pop %v154
    %v298 = vmul.f32 %v154, %v297
    %vm299 = vcmp.eq.f32.partialorder %v154, inf
    %v300 = vsel %vm299, %v154, %v298
    %vm301 = vcmp.eq.f32.partialorder %v154, 0.0
    %v302 = vand.u32 %v154, 2147483648
    %v303 = vsel %vm301, %v302, %v300
    %v304 = vrsqrt.pop %v156
    %v305 = vmul.f32 %v156, %v304
    %vm306 = vcmp.eq.f32.partialorder %v156, inf
    %v307 = vsel %vm306, %v156, %v305
    %vm308 = vcmp.eq.f32.partialorder %v156, 0.0
    %v309 = vand.u32 %v156, 2147483648
    %v310 = vsel %vm308, %v309, %v307
    %v311 = vrsqrt.pop %v158
    %v312 = vmul.f32 %v158, %v311
    %vm313 = vcmp.eq.f32.partialorder %v158, inf
    %v314 = vsel %vm313, %v158, %v312
    %vm315 = vcmp.eq.f32.partialorder %v158, 0.0
    %v316 = vand.u32 %v158, 2147483648
    %v317 = vsel %vm315, %v316, %v314
    %v318 = vrsqrt.pop %v160
    %v319 = vmul.f32 %v160, %v318
    %vm320 = vcmp.eq.f32.partialorder %v160, inf
    %v321 = vsel %vm320, %v160, %v319
    %vm322 = vcmp.eq.f32.partialorder %v160, 0.0
    %v323 = vand.u32 %v160, 2147483648
    %v324 = vsel %vm322, %v323, %v321
    %v325 = vrsqrt.pop %v162
    %v326 = vmul.f32 %v162, %v325
    %vm327 = vcmp.eq.f32.partialorder %v162, inf
    %v328 = vsel %vm327, %v162, %v326
    %vm329 = vcmp.eq.f32.partialorder %v162, 0.0
    %v330 = vand.u32 %v162, 2147483648
    %v331 = vsel %vm329, %v330, %v328
    %v332 = vrsqrt.pop %v164
    %v333 = vmul.f32 %v164, %v332
    %vm334 = vcmp.eq.f32.partialorder %v164, inf
    %v335 = vsel %vm334, %v164, %v333
    %vm336 = vcmp.eq.f32.partialorder %v164, 0.0
    %v337 = vand.u32 %v164, 2147483648
    %v338 = vsel %vm336, %v337, %v335
    %v339 = vrsqrt.pop %v166
    %v340 = vmul.f32 %v166, %v339
    %vm341 = vcmp.eq.f32.partialorder %v166, inf
    %v342 = vsel %vm341, %v166, %v340
    %vm343 = vcmp.eq.f32.partialorder %v166, 0.0
    %v344 = vand.u32 %v166, 2147483648
    %v345 = vsel %vm343, %v344, %v342
    %v346 = vrsqrt.pop %v168
    %v347 = vmul.f32 %v168, %v346
    %vm348 = vcmp.eq.f32.partialorder %v168, inf
    %v349 = vsel %vm348, %v168, %v347
    %vm350 = vcmp.eq.f32.partialorder %v168, 0.0
    %v351 = vand.u32 %v168, 2147483648
    %v352 = vsel %vm350, %v351, %v349
    %v353 = vrsqrt.pop %v170
    %v354 = vmul.f32 %v170, %v353
    %vm355 = vcmp.eq.f32.partialorder %v170, inf
    %v356 = vsel %vm355, %v170, %v354
    %vm357 = vcmp.eq.f32.partialorder %v170, 0.0
    %v358 = vand.u32 %v170, 2147483648
    %v359 = vsel %vm357, %v358, %v356
    %v360 = vrsqrt.pop %v172
    %v361 = vmul.f32 %v172, %v360
    %vm362 = vcmp.eq.f32.partialorder %v172, inf
    %v363 = vsel %vm362, %v172, %v361
    %vm364 = vcmp.eq.f32.partialorder %v172, 0.0
    %v365 = vand.u32 %v172, 2147483648
    %v366 = vsel %vm364, %v365, %v363
    %v367 = vrsqrt.pop %v174
    %v368 = vmul.f32 %v174, %v367
    %vm369 = vcmp.eq.f32.partialorder %v174, inf
    %v370 = vsel %vm369, %v174, %v368
    %vm371 = vcmp.eq.f32.partialorder %v174, 0.0
    %v372 = vand.u32 %v174, 2147483648
    %v373 = vsel %vm371, %v372, %v370
    %v374 = vrsqrt.pop %v176
    %v375 = vmul.f32 %v176, %v374
    %vm376 = vcmp.eq.f32.partialorder %v176, inf
    %v377 = vsel %vm376, %v176, %v375
    %vm378 = vcmp.eq.f32.partialorder %v176, 0.0
    %v379 = vand.u32 %v176, 2147483648
    %v380 = vsel %vm378, %v379, %v377
    %v381 = vrsqrt.pop %v178
    %v382 = vmul.f32 %v178, %v381
    %vm383 = vcmp.eq.f32.partialorder %v178, inf
    %v384 = vsel %vm383, %v178, %v382
    %vm385 = vcmp.eq.f32.partialorder %v178, 0.0
    %v386 = vand.u32 %v178, 2147483648
    %v387 = vsel %vm385, %v386, %v384
    %v388 = vrsqrt.pop %v180
    %v389 = vmul.f32 %v180, %v388
    %vm390 = vcmp.eq.f32.partialorder %v180, inf
    %v391 = vsel %vm390, %v180, %v389
    %vm392 = vcmp.eq.f32.partialorder %v180, 0.0
    %v393 = vand.u32 %v180, 2147483648
    %v394 = vsel %vm392, %v393, %v391
    %v395 = vrsqrt.pop %v182
    %v396 = vmul.f32 %v182, %v395
    %vm397 = vcmp.eq.f32.partialorder %v182, inf
    %v398 = vsel %vm397, %v182, %v396
    %vm399 = vcmp.eq.f32.partialorder %v182, 0.0
    %v400 = vand.u32 %v182, 2147483648
    %v401 = vsel %vm399, %v400, %v398
    %v402 = vrsqrt.pop %v184
    %v403 = vmul.f32 %v184, %v402
    %vm404 = vcmp.eq.f32.partialorder %v184, inf
    %v405 = vsel %vm404, %v184, %v403
    %vm406 = vcmp.eq.f32.partialorder %v184, 0.0
    %v407 = vand.u32 %v184, 2147483648
    %v408 = vsel %vm406, %v407, %v405
    %vm409 = vcmp.gt.f32.partialorder %v191, 1.0
    %vm410 = vcmp.gt.f32.partialorder %v198, 1.0
    %vm411 = vcmp.gt.f32.partialorder %v205, 1.0
    %vm412 = vcmp.gt.f32.partialorder %v212, 1.0
    %vm413 = vcmp.gt.f32.partialorder %v219, 1.0
    %vm414 = vcmp.gt.f32.partialorder %v226, 1.0
    %vm415 = vcmp.gt.f32.partialorder %v233, 1.0
    %vm416 = vcmp.gt.f32.partialorder %v240, 1.0
    %vm417 = vcmp.gt.f32.partialorder %v247, 1.0
    %vm418 = vcmp.gt.f32.partialorder %v254, 1.0
    %vm419 = vcmp.gt.f32.partialorder %v261, 1.0
    %vm420 = vcmp.gt.f32.partialorder %v268, 1.0
    %vm421 = vcmp.gt.f32.partialorder %v275, 1.0
    %vm422 = vcmp.gt.f32.partialorder %v282, 1.0
    %vm423 = vcmp.gt.f32.partialorder %v289, 1.0
    %vm424 = vcmp.gt.f32.partialorder %v296, 1.0
    %vm425 = vcmp.gt.f32.partialorder %v303, 1.0
    %vm426 = vcmp.gt.f32.partialorder %v310, 1.0
    %vm427 = vcmp.gt.f32.partialorder %v317, 1.0
    %vm428 = vcmp.gt.f32.partialorder %v324, 1.0
    %vm429 = vcmp.gt.f32.partialorder %v331, 1.0
    %vm430 = vcmp.gt.f32.partialorder %v338, 1.0
    %vm431 = vcmp.gt.f32.partialorder %v345, 1.0
    %vm432 = vcmp.gt.f32.partialorder %v352, 1.0
    %vm433 = vcmp.gt.f32.partialorder %v359, 1.0
    %vm434 = vcmp.gt.f32.partialorder %v366, 1.0
    %vm435 = vcmp.gt.f32.partialorder %v373, 1.0
    %vm436 = vcmp.gt.f32.partialorder %v380, 1.0
    %vm437 = vcmp.gt.f32.partialorder %v387, 1.0
    %vm438 = vcmp.gt.f32.partialorder %v394, 1.0
    %vm439 = vcmp.gt.f32.partialorder %v401, 1.0
    %vm440 = vcmp.gt.f32.partialorder %v408, 1.0
    %v441 = vadd.f32 %v191, 1e-07
    %v442 = vadd.f32 %v198, 1e-07
    %v443 = vadd.f32 %v205, 1e-07
    %v444 = vadd.f32 %v212, 1e-07
    %v445 = vadd.f32 %v219, 1e-07
    %v446 = vadd.f32 %v226, 1e-07
    %v447 = vadd.f32 %v233, 1e-07
    %v448 = vadd.f32 %v240, 1e-07
    %v449 = vadd.f32 %v247, 1e-07
    %v450 = vadd.f32 %v254, 1e-07
    %v451 = vadd.f32 %v261, 1e-07
    %v452 = vadd.f32 %v268, 1e-07
    %v453 = vadd.f32 %v275, 1e-07
    %v454 = vadd.f32 %v282, 1e-07
    %v455 = vadd.f32 %v289, 1e-07
    %v456 = vadd.f32 %v296, 1e-07
    %v457 = vadd.f32 %v303, 1e-07
    %v458 = vadd.f32 %v310, 1e-07
    %v459 = vadd.f32 %v317, 1e-07
    %v460 = vadd.f32 %v324, 1e-07
    %v461 = vadd.f32 %v331, 1e-07
    %v462 = vadd.f32 %v338, 1e-07
    %v463 = vadd.f32 %v345, 1e-07
    %v464 = vadd.f32 %v352, 1e-07
    %v465 = vadd.f32 %v359, 1e-07
    %v466 = vadd.f32 %v366, 1e-07
    %v467 = vadd.f32 %v373, 1e-07
    %v468 = vadd.f32 %v380, 1e-07
    %v469 = vadd.f32 %v387, 1e-07
    %v470 = vadd.f32 %v394, 1e-07
    %v471 = vadd.f32 %v401, 1e-07
    %v472 = vadd.f32 %v408, 1e-07
    %v473 = vrcp.pop %v441
    %v474 = vmul.f32 1.0, %v473
    %v475 = vrcp.pop %v442
    %v476 = vmul.f32 1.0, %v475
    %v477 = vrcp.pop %v443
    %v478 = vmul.f32 1.0, %v477
    %v479 = vrcp.pop %v444
    %v480 = vmul.f32 1.0, %v479
    %v481 = vrcp.pop %v445
    %v482 = vmul.f32 1.0, %v481
    %v483 = vrcp.pop %v446
    %v484 = vmul.f32 1.0, %v483
    %v485 = vrcp.pop %v447
    %v486 = vmul.f32 1.0, %v485
    %v487 = vrcp.pop %v448
    %v488 = vmul.f32 1.0, %v487
    %v489 = vrcp.pop %v449
    %v490 = vmul.f32 1.0, %v489
    %v491 = vrcp.pop %v450
    %v492 = vmul.f32 1.0, %v491
    %v493 = vrcp.pop %v451
    %v494 = vmul.f32 1.0, %v493
    %v495 = vrcp.pop %v452
    %v496 = vmul.f32 1.0, %v495
    %v497 = vrcp.pop %v453
    %v498 = vmul.f32 1.0, %v497
    %v499 = vrcp.pop %v454
    %v500 = vmul.f32 1.0, %v499
    %v501 = vrcp.pop %v455
    %v502 = vmul.f32 1.0, %v501
    %v503 = vrcp.pop %v456
    %v504 = vmul.f32 1.0, %v503
    %v505 = vrcp.pop %v457
    %v506 = vmul.f32 1.0, %v505
    %v507 = vrcp.pop %v458
    %v508 = vmul.f32 1.0, %v507
    %v509 = vrcp.pop %v459
    %v510 = vmul.f32 1.0, %v509
    %v511 = vrcp.pop %v460
    %v512 = vmul.f32 1.0, %v511
    %v513 = vrcp.pop %v461
    %v514 = vmul.f32 1.0, %v513
    %v515 = vrcp.pop %v462
    %v516 = vmul.f32 1.0, %v515
    %v517 = vrcp.pop %v463
    %v518 = vmul.f32 1.0, %v517
    %v519 = vrcp.pop %v464
    %v520 = vmul.f32 1.0, %v519
    %v521 = vrcp.pop %v465
    %v522 = vmul.f32 1.0, %v521
    %v523 = vrcp.pop %v466
    %v524 = vmul.f32 1.0, %v523
    %v525 = vrcp.pop %v467
    %v526 = vmul.f32 1.0, %v525
    %v527 = vrcp.pop %v468
    %v528 = vmul.f32 1.0, %v527
    %v529 = vrcp.pop %v469
    %v530 = vmul.f32 1.0, %v529
    %v531 = vrcp.pop %v470
    %v532 = vmul.f32 1.0, %v531
    %v533 = vrcp.pop %v471
    %v534 = vmul.f32 1.0, %v533
    %v535 = vrcp.pop %v472
    %v536 = vmul.f32 1.0, %v535
    %v537 = vsel %vm409, %v474, 1.0
    %v538 = vsel %vm410, %v476, 1.0
    %v539 = vsel %vm411, %v478, 1.0
    %v540 = vsel %vm412, %v480, 1.0
    %v541 = vsel %vm413, %v482, 1.0
    %v542 = vsel %vm414, %v484, 1.0
    %v543 = vsel %vm415, %v486, 1.0
    %v544 = vsel %vm416, %v488, 1.0
    %v545 = vsel %vm417, %v490, 1.0
    %v546 = vsel %vm418, %v492, 1.0
    %v547 = vsel %vm419, %v494, 1.0
    %v548 = vsel %vm420, %v496, 1.0
    %v549 = vsel %vm421, %v498, 1.0
    %v550 = vsel %vm422, %v500, 1.0
    %v551 = vsel %vm423, %v502, 1.0
    %v552 = vsel %vm424, %v504, 1.0
    %v553 = vsel %vm425, %v506, 1.0
    %v554 = vsel %vm426, %v508, 1.0
    %v555 = vsel %vm427, %v510, 1.0
    %v556 = vsel %vm428, %v512, 1.0
    %v557 = vsel %vm429, %v514, 1.0
    %v558 = vsel %vm430, %v516, 1.0
    %v559 = vsel %vm431, %v518, 1.0
    %v560 = vsel %vm432, %v520, 1.0
    %v561 = vsel %vm433, %v522, 1.0
    %v562 = vsel %vm434, %v524, 1.0
    %v563 = vsel %vm435, %v526, 1.0
    %v564 = vsel %vm436, %v528, 1.0
    %v565 = vsel %vm437, %v530, 1.0
    %v566 = vsel %vm438, %v532, 1.0
    %v567 = vsel %vm439, %v534, 1.0
    %v568 = vsel %vm440, %v536, 1.0
    %v569 = vmul.f32 %v57, %v537
    %v570 = vmul.f32 %v58, %v538
    %v571 = vmul.f32 %v59, %v539
    %v572 = vmul.f32 %v60, %v540
    %v573 = vmul.f32 %v61, %v541
    %v574 = vmul.f32 %v62, %v542
    %v575 = vmul.f32 %v63, %v543
    %v576 = vmul.f32 %v64, %v544
    %v577 = vmul.f32 %v65, %v545
    %v578 = vmul.f32 %v66, %v546
    %v579 = vmul.f32 %v67, %v547
    %v580 = vmul.f32 %v68, %v548
    %v581 = vmul.f32 %v69, %v549
    %v582 = vmul.f32 %v70, %v550
    %v583 = vmul.f32 %v71, %v551
    %v584 = vmul.f32 %v72, %v552
    %v585 = vmul.f32 %v73, %v553
    %v586 = vmul.f32 %v74, %v554
    %v587 = vmul.f32 %v75, %v555
    %v588 = vmul.f32 %v76, %v556
    %v589 = vmul.f32 %v77, %v557
    %v590 = vmul.f32 %v78, %v558
    %v591 = vmul.f32 %v79, %v559
    %v592 = vmul.f32 %v80, %v560
    %v593 = vmul.f32 %v81, %v561
    %v594 = vmul.f32 %v82, %v562
    %v595 = vmul.f32 %v83, %v563
    %v596 = vmul.f32 %v84, %v564
    %v597 = vmul.f32 %v85, %v565
    %v598 = vmul.f32 %v86, %v566
    %v599 = vmul.f32 %v87, %v567
    %v600 = vmul.f32 %v88, %v568
    %v601 = vld [vmem:[#allocation2] sm:$0xff]
    %v602 = vld [vmem:[#allocation2 + $0x8] sm:$0xff]
    %603 = vmatprep.subr.mxu0 0.0
    %604 = vmatpush1.msra.mxu0 %v569
    %605 = vmatprep.subr.mxu0 0.0
    %606 = vmatpush1.msra.mxu0 %v570
    %607 = vmatprep.subr.mxu0 0.0
    %608 = vmatpush1.msra.mxu0 %v571
    %609 = vmatprep.subr.mxu0 0.0
    %610 = vmatpush1.msra.mxu0 %v572
    %611 = vmatprep.subr.mxu0 0.0
    %612 = vmatpush1.msra.mxu0 %v573
    %613 = vmatprep.subr.mxu0 0.0
    %614 = vmatpush1.msra.mxu0 %v574
    %615 = vmatprep.subr.mxu0 0.0
    %616 = vmatpush1.msra.mxu0 %v575
    %617 = vmatprep.subr.mxu0 0.0
    %618 = vmatpush1.msra.mxu0 %v576
    %619 = vmatprep.subr.mxu0 0.0
    %620 = vmatpush1.msra.mxu0 %v577
    %621 = vmatprep.subr.mxu0 0.0
    %622 = vmatpush1.msra.mxu0 %v578
    %623 = vmatprep.subr.mxu0 0.0
    %624 = vmatpush1.msra.mxu0 %v579
    %625 = vmatprep.subr.mxu0 0.0
    %626 = vmatpush1.msra.mxu0 %v580
    %627 = vmatprep.subr.mxu0 0.0
    %628 = vmatpush1.msra.mxu0 %v581
    %629 = vmatprep.subr.mxu0 0.0
    %630 = vmatpush1.msra.mxu0 %v582
    %631 = vmatprep.subr.mxu0 0.0
    %632 = vmatpush1.msra.mxu0 %v583
    %633 = vmatprep.subr.mxu0 0.0
    %634 = vmatpush1.msra.mxu0 %v584
    %635 = vmatprep.subr.mxu0 0.0
    %636 = vmatpush1.msra.mxu0 %v585
    %637 = vmatprep.subr.mxu0 0.0
    %638 = vmatpush1.msra.mxu0 %v586
    %639 = vmatprep.subr.mxu0 0.0
    %640 = vmatpush1.msra.mxu0 %v587
    %641 = vmatprep.subr.mxu0 0.0
    %642 = vmatpush1.msra.mxu0 %v588
    %643 = vmatprep.subr.mxu0 0.0
    %644 = vmatpush1.msra.mxu0 %v589
    %645 = vmatprep.subr.mxu0 0.0
    %646 = vmatpush1.msra.mxu0 %v590
    %647 = vmatprep.subr.mxu0 0.0
    %648 = vmatpush1.msra.mxu0 %v591
    %649 = vmatprep.subr.mxu0 0.0
    %650 = vmatpush1.msra.mxu0 %v592
    %651 = vmatprep.subr.mxu0 0.0
    %652 = vmatpush1.msra.mxu0 %v593
    %653 = vmatprep.subr.mxu0 0.0
    %654 = vmatpush1.msra.mxu0 %v594
    %655 = vmatprep.subr.mxu0 0.0
    %656 = vmatpush1.msra.mxu0 %v595
    %657 = vmatprep.subr.mxu0 0.0
    %658 = vmatpush1.msra.mxu0 %v596
    %659 = vmatprep.subr.mxu0 0.0
    %660 = vmatpush1.msra.mxu0 %v597
    %661 = vmatprep.subr.mxu0 0.0
    %662 = vmatpush1.msra.mxu0 %v598
    %663 = vmatprep.subr.mxu0 0.0
    %664 = vmatpush1.msra.mxu0 %v599
    %665 = vmatprep.subr.mxu0 0.0
    %666 = vmatpush1.msra.mxu0 %v600
    %667 = vmatprep.mubr.f32.mxu0 %v602
    %668 = vmatmul.mubr.f32.gmra.mrb[0].mxu0 %v601
    %v669 = vpop.f32.mrb[0].mxu0
    %v670 = vadd.f32 0.0, %v669
    %v671 = vpop.f32.mrb[0].mxu0
    %672 = vdwg.mxu0
    %v673 = vld [vmem:[#allocation7] sm:$0xff]
    %v674 = vld [vmem:[#allocation7 + $0x8] sm:$0xff]
    %v675 = vld [vmem:[#allocation7 + $0x10] sm:$0xff]
    %v676 = vld [vmem:[#allocation7 + $0x18] sm:$0xff]
    %v677 = vld [vmem:[#allocation7 + $0x20] sm:$0xff]
    %v678 = vld [vmem:[#allocation7 + $0x28] sm:$0xff]
    %v679 = vld [vmem:[#allocation7 + $0x30] sm:$0xff]
    %v680 = vld [vmem:[#allocation7 + $0x38] sm:$0xff]
    %v681 = vld [vmem:[#allocation7 + $0x40] sm:$0xff]
    %v682 = vld [vmem:[#allocation7 + $0x48] sm:$0xff]
    %v683 = vld [vmem:[#allocation7 + $0x50] sm:$0xff]
    %v684 = vld [vmem:[#allocation7 + $0x58] sm:$0xff]
    %v685 = vld [vmem:[#allocation7 + $0x60] sm:$0xff]
    %v686 = vld [vmem:[#allocation7 + $0x68] sm:$0xff]
    %v687 = vld [vmem:[#allocation7 + $0x70] sm:$0xff]
    %v688 = vld [vmem:[#allocation7 + $0x78] sm:$0xff]
    %v689 = vld [vmem:[#allocation7 + $0x80] sm:$0xff]
    %v690 = vld [vmem:[#allocation7 + $0x88] sm:$0xff]
    %v691 = vld [vmem:[#allocation7 + $0x90] sm:$0xff]
    %v692 = vld [vmem:[#allocation7 + $0x98] sm:$0xff]
    %v693 = vld [vmem:[#allocation7 + $0xa0] sm:$0xff]
    %v694 = vld [vmem:[#allocation7 + $0xa8] sm:$0xff]
    %v695 = vld [vmem:[#allocation7 + $0xb0] sm:$0xff]
    %v696 = vld [vmem:[#allocation7 + $0xb8] sm:$0xff]
    %v697 = vld [vmem:[#allocation7 + $0xc0] sm:$0xff]
    %v698 = vld [vmem:[#allocation7 + $0xc8] sm:$0xff]
    %v699 = vld [vmem:[#allocation7 + $0xd0] sm:$0xff]
    %v700 = vld [vmem:[#allocation7 + $0xd8] sm:$0xff]
    %v701 = vld [vmem:[#allocation7 + $0xe0] sm:$0xff]
    %v702 = vld [vmem:[#allocation7 + $0xe8] sm:$0xff]
    %v703 = vld [vmem:[#allocation7 + $0xf0] sm:$0xff]
    %v704 = vld [vmem:[#allocation7 + $0xf8] sm:$0xff]
    %v705 = vld [vmem:[%s3] sm:$0x3]
    %v707 = vlaneseq
    %v708 = vshrl.u32 %v707, 7
    %v709 = vsub.s32 0, %v708
    %v710 = vrot.slane %v705, %v709
    %v711 = vlaneseq
    %v712 = vshrl.u32 %v711, 7
    %v713 = vsub.s32 1, %v712
    %v714 = vrot.slane %v705, %v713
    %717 = vmatprep.subr.mxu0 %v674
    %718 = vmatpush1.msra.mxu0 %v673
    %719 = vmatprep.subr.mxu0 %v676
    %720 = vmatpush1.msra.mxu0 %v675
    %721 = vmatprep.subr.mxu0 %v678
    %722 = vmatpush1.msra.mxu0 %v677
    %723 = vmatprep.subr.mxu0 %v680
    %724 = vmatpush1.msra.mxu0 %v679
    %725 = vmatprep.subr.mxu0 %v682
    %726 = vmatpush1.msra.mxu0 %v681
    %727 = vmatprep.subr.mxu0 %v684
    %728 = vmatpush1.msra.mxu0 %v683
    %729 = vmatprep.subr.mxu0 %v686
    %730 = vmatpush1.msra.mxu0 %v685
    %731 = vmatprep.subr.mxu0 %v688
    %732 = vmatpush1.msra.mxu0 %v687
    %733 = vmatprep.subr.mxu0 %v690
    %734 = vmatpush1.msra.mxu0 %v689
    %735 = vmatprep.subr.mxu0 %v692
    %736 = vmatpush1.msra.mxu0 %v691
    %737 = vmatprep.subr.mxu0 %v694
    %738 = vmatpush1.msra.mxu0 %v693
    %739 = vmatprep.subr.mxu0 %v696
    %740 = vmatpush1.msra.mxu0 %v695
    %741 = vmatprep.subr.mxu0 %v698
    %742 = vmatpush1.msra.mxu0 %v697
    %743 = vmatprep.subr.mxu0 %v700
    %744 = vmatpush1.msra.mxu0 %v699
    %745 = vmatprep.subr.mxu0 %v702
    %746 = vmatpush1.msra.mxu0 %v701
    %747 = vmatprep.subr.mxu0 %v704
    %748 = vmatpush1.msra.mxu0 %v703
    %749 = vmatprep.subr.mxu0 0.0
    %750 = vmatpush1.msra.mxu0 0.0
    %751 = vmatprep.subr.mxu0 0.0
    %752 = vmatpush1.msra.mxu0 0.0
    %753 = vmatprep.subr.mxu0 0.0
    %754 = vmatpush1.msra.mxu0 0.0
    %755 = vmatprep.subr.mxu0 0.0
    %756 = vmatpush1.msra.mxu0 0.0
    %757 = vmatprep.subr.mxu0 0.0
    %758 = vmatpush1.msra.mxu0 0.0
    %759 = vmatprep.subr.mxu0 0.0
    %760 = vmatpush1.msra.mxu0 0.0
    %761 = vmatprep.subr.mxu0 0.0
    %762 = vmatpush1.msra.mxu0 0.0
    %763 = vmatprep.subr.mxu0 0.0
    %764 = vmatpush1.msra.mxu0 0.0
    %765 = vmatprep.subr.mxu0 0.0
    %766 = vmatpush1.msra.mxu0 0.0
    %767 = vmatprep.subr.mxu0 0.0
    %768 = vmatpush1.msra.mxu0 0.0
    %769 = vmatprep.subr.mxu0 0.0
    %770 = vmatpush1.msra.mxu0 0.0
    %771 = vmatprep.subr.mxu0 0.0
    %772 = vmatpush1.msra.mxu0 0.0
    %773 = vmatprep.subr.mxu0 0.0
    %774 = vmatpush1.msra.mxu0 0.0
    %775 = vmatprep.subr.mxu0 0.0
    %776 = vmatpush1.msra.mxu0 0.0
    %777 = vmatprep.subr.mxu0 0.0
    %778 = vmatpush1.msra.mxu0 0.0
    %779 = vmatprep.subr.mxu0 0.0
    %780 = vmatpush1.msra.mxu0 0.0
    %781 = vmatprep.mubr.f32.mxu0 0.0
    %782 = vmatmul.mubr.f32.gmra.mrb[0].mxu0 %v670
    %v783 = vpop.f32.mrb[0].mxu0
    %v784 = vadd.f32 %v710, %v783
    %v785 = vpop.f32.mrb[0].mxu0
    %v786 = vadd.f32 %v714, %v785
    %787 = vdwg.mxu0
    %788 = vst [vmem:[#allocation8] sm:$0xff] %v784
    %789 = vst [vmem:[#allocation8 + $0x8] sm:$0xff] %v786
    // Predicated region
    $region30: #{tpu_custom_call.1} parent=1 // pred_check
      _
    $region31: #{tpu_custom_call.1} parent=1 // pred_check_branch
      %791 = sbr.rel (0) target = $region33
    $region32: #{tpu_custom_call.1} parent=1 // pred_region
      %s793 = ssub.s32 256, 256
      %794 = vsyncadd [#allocation4], %s793
      %s796 = sshll.u32 [#allocation8], 4
      %s797 = int_to_ptr.vmem [resolvable:$true] %s796
      %799 = dma.vmem_to_hbm [thread:$0]  %s797, 256, %s4, [#allocation4]
    $region33: #{tpu_custom_call.1} parent=1 // pred_fallthru
      _
    // Predicated region
    $region34: #{tpu_custom_call.1} parent=1 // pred_check
      _
    $region35: #{tpu_custom_call.1} parent=1 // pred_check_branch
      %801 = sbr.rel (0) target = $region37
    $region36: #{tpu_custom_call.1} parent=1 // pred_region
      %802 = dma.done [#allocation4], 256
    $region37: #{tpu_custom_call.1} parent=1 // pred_fallthru
      _
    %803 = vsyncpa [#allocation3], 1
    %804 = vsyncpa [#allocation6], 1
    %805 = vsyncpa [#allocation4], 1

</llo_original>
